<compile_context>
chip_gen: v7x
topology: tpu7x:2x2x1
jax: 0.10.0
libtpu: 0.0.40
codegen_flags: <defaults>
</compile_context>

<pallas_src>
import functools

import jax
import jax.numpy as jnp
from jax.experimental import pallas as pl
from jax.experimental.pallas import tpu as pltpu


def _round_up(v, m):
    return ((v + m - 1) // m) * m


def _pooling_mlp_kernel(x_ref, seg_ref, w1_ref, b1_ref, w2_ref, b2_ref,
                        out_ref, sum_ref, cnt_ref, *, n_nodes):
    k = pl.program_id(0)
    tn = x_ref.shape[0]
    b_pad = sum_ref.shape[0]

    # ---- init accumulators on the first node chunk ----
    @pl.when(k == 0)
    def _init():
        sum_ref[...] = jnp.zeros_like(sum_ref)
        cnt_ref[...] = jnp.zeros_like(cnt_ref)

    # ---- valid-row mask for the (possibly ragged) last tile ----
    # x is unpadded in HBM: rows read past the end are undefined and MUST be zeroed
    # with a select (0.0 * NaN == NaN would otherwise poison the sums).
    row_ids = k * tn + jax.lax.broadcasted_iota(jnp.int32, (tn, 1), 0)
    valid = row_ids < n_nodes                                   # [tn, 1] bool
    x = jnp.where(valid, x_ref[...], 0.0)                       # [tn, idim] f32
    valid_f = valid.astype(jnp.float32)                         # [tn, 1]

    # ---- per-tile segment sums via one-hot matmul (MXU) ----
    seg = seg_ref[...]                                          # [1, tn] int32 (sentinel for pads)
    graph_ids = jax.lax.broadcasted_iota(jnp.int32, (b_pad, tn), 0)
    onehot = (graph_ids == seg).astype(jnp.float32)             # [b_pad, tn], exact 0/1

    sum_ref[...] += jnp.dot(onehot, x, preferred_element_type=jnp.float32)
    # Counts as a second tiny MXU matmul (no cross-lane XLU reduce per step).
    cnt_ref[...] += jnp.dot(onehot, valid_f, preferred_element_type=jnp.float32)

    # ---- finalize on last chunk: mean + MLP, single lane-dense store ----
    @pl.when(k == pl.num_programs(0) - 1)
    def _finalize():
        pooled = sum_ref[...] / jnp.maximum(cnt_ref[...], 1.0)  # [b_pad, idim]
        h = jnp.dot(pooled, w1_ref[...], preferred_element_type=jnp.float32) + b1_ref[...]
        h = jnp.maximum(h, 0.0)
        out = jnp.dot(h, w2_ref[...], preferred_element_type=jnp.float32) + b2_ref[...]
        out_ref[...] = out.astype(out_ref.dtype)


def pooling_forward(x, batch_idx, w1, b1, w2, b2, num_graphs, *, node_tile=4096):
    """x: [N, idim] f32, batch_idx: [N] int32 -> [num_graphs, odim] f32."""
    n_nodes, idim = x.shape
    hdim = w1.shape[1]
    odim = w2.shape[1]

    # Node tile: multiple of 128 (lane-dense seg tile, sublane-aligned x tile),
    # clamped so tiny inputs still run a single step.
    tn = min(int(node_tile), _round_up(max(n_nodes, 1), 128))
    tn = max(_round_up(tn, 128), 128)
    n_pad = _round_up(max(n_nodes, 1), tn)
    grid = (n_pad // tn,)

    b_pad = max(_round_up(num_graphs, 8), 8)        # sublane-aligned graph rows
    h_pad = max(_round_up(hdim, 128), 128)          # lane-dense hidden dim
    o_pad = max(_round_up(odim, 128), 128)          # lane-dense output dim

    # Dominant tensor x is passed through untouched (no wrapper-side pad/copy pass).
    x = x.astype(jnp.float32)
    # Node->graph ids padded with sentinel b_pad (never matches a one-hot row); tiny.
    seg_p = jnp.full((1, n_pad), b_pad, jnp.int32).at[0, :n_nodes].set(
        batch_idx.astype(jnp.int32))

    # Zero-padded weights: padded hidden/output columns contribute nothing.
    w1_p = jnp.zeros((idim, h_pad), jnp.float32).at[:, :hdim].set(w1.astype(jnp.float32))
    b1_p = jnp.zeros((1, h_pad), jnp.float32).at[0, :hdim].set(b1.astype(jnp.float32))
    w2_p = jnp.zeros((h_pad, o_pad), jnp.float32).at[:hdim, :odim].set(w2.astype(jnp.float32))
    b2_p = jnp.zeros((1, o_pad), jnp.float32).at[0, :odim].set(b2.astype(jnp.float32))

    # VMEM budget: the (tn, idim) x tile lane-pads to 128 lanes in VMEM, so cost the
    # double-buffered x stream plus in-kernel temporaries at the padded width.
    x_blk_bytes = tn * max(_round_up(idim, 128), 128) * 4
    vmem_bytes = int(min(max(4 * x_blk_bytes + (8 << 20), 16 << 20), 64 << 20))

    kernel = functools.partial(_pooling_mlp_kernel, n_nodes=n_nodes)

    out_p = pl.pallas_call(
        kernel,
        out_shape=jax.ShapeDtypeStruct((b_pad, o_pad), jnp.float32),
        grid_spec=pltpu.PrefetchScalarGridSpec(
            num_scalar_prefetch=0,
            grid=grid,
            in_specs=[
                pl.BlockSpec((tn, idim), lambda k: (k, 0)),       # streamed node features
                pl.BlockSpec((1, tn), lambda k: (0, k)),          # streamed node->graph ids
                pl.BlockSpec((idim, h_pad), lambda k: (0, 0)),    # resident W1
                pl.BlockSpec((1, h_pad), lambda k: (0, 0)),       # resident b1
                pl.BlockSpec((h_pad, o_pad), lambda k: (0, 0)),   # resident W2
                pl.BlockSpec((1, o_pad), lambda k: (0, 0)),       # resident b2
            ],
            out_specs=pl.BlockSpec((b_pad, o_pad), lambda k: (0, 0)),
            scratch_shapes=[
                pltpu.VMEM((b_pad, idim), jnp.float32),           # running segment sums
                pltpu.VMEM((b_pad, 1), jnp.float32),              # running segment counts
            ],
        ),
        compiler_params=pltpu.CompilerParams(
            dimension_semantics=("arbitrary",),                   # node axis is a reduction
            vmem_limit_bytes=vmem_bytes,
        ),
    )(x, seg_p, w1_p, b1_p, w2_p, b2_p)

    return out_p[:num_graphs, :odim]


def reference_forward(x, batch_idx, w1, b1, w2, b2, num_graphs):
    sums = jax.ops.segment_sum(x, batch_idx, num_segments=num_graphs)
    counts = jax.ops.segment_sum(jnp.ones((x.shape[0],), jnp.float32),
                                 batch_idx, num_segments=num_graphs)
    pooled = sums / jnp.maximum(counts, 1.0)[:, None]
    h = jnp.maximum(pooled @ w1 + b1, 0.0)
    return h @ w2 + b2


if __name__ == "__main__":
    # Small synthetic shapes implied by the forward pass; node_tile=128 so the grid has
    # several steps and a ragged tail, exercising init / accumulate / mask / finalize.
    N_NODES = 300     # total nodes across the batch of graphs
    NUM_GRAPHS = 3    # number of graphs in the batch
    IDIM = 32
    HDIM = 2 * IDIM   # MLP(idim, odim, hdim=idim*2, norm=False)
    ODIM = 16

    key = jax.random.PRNGKey(0)
    kx, kb, kw1, kb1, kw2, kb2 = jax.random.split(key, 6)

    x = jax.random.normal(kx, (N_NODES, IDIM), dtype=jnp.float32)
    # Node -> graph assignment (like batch.batch in PyG).
    batch_idx = jax.random.randint(kb, (N_NODES,), 0, NUM_GRAPHS, dtype=jnp.int32)

    # Deterministic parameter init (synthetic; stored as [in, out]).
    w1 = jax.random.normal(kw1, (IDIM, HDIM), dtype=jnp.float32) * (1.0 / jnp.sqrt(IDIM))
    b1 = jax.random.normal(kb1, (HDIM,), dtype=jnp.float32) * 0.01
    w2 = jax.random.normal(kw2, (HDIM, ODIM), dtype=jnp.float32) * (1.0 / jnp.sqrt(HDIM))
    b2 = jax.random.normal(kb2, (ODIM,), dtype=jnp.float32) * 0.01

    out = pooling_forward(x, batch_idx, w1, b1, w2, b2, NUM_GRAPHS, node_tile=128)
    out = jax.block_until_ready(out)

    ref = reference_forward(x, batch_idx, w1, b1, w2, b2, NUM_GRAPHS)
    assert out.shape == (NUM_GRAPHS, ODIM)
    assert jnp.allclose(out, ref, atol=5e-4, rtol=1e-4), "mismatch vs reference"

    print("KERNEL_OK")
</pallas_src>

<mosaic_0001>
module attributes {stable_mosaic.version = 11 : i64} {
  func.func @_pooling_mlp_kernel(%arg0: i32, %arg1: memref<128x32xf32, #tpu.memory_space<vmem>>, %arg2: memref<1x128xi32, #tpu.memory_space<vmem>>, %arg3: memref<32x128xf32, #tpu.memory_space<vmem>>, %arg4: memref<1x128xf32, #tpu.memory_space<vmem>>, %arg5: memref<128x128xf32, #tpu.memory_space<vmem>>, %arg6: memref<1x128xf32, #tpu.memory_space<vmem>>, %arg7: memref<8x128xf32, #tpu.memory_space<vmem>>, %arg8: memref<8x32xf32, #tpu.memory_space<vmem>>, %arg9: memref<8x1xf32, #tpu.memory_space<vmem>>) attributes {dimension_semantics = [#tpu.dimension_semantics<arbitrary>], iteration_bounds = array<i64: 3>, scalar_prefetch = 0 : i64, scratch_operands = 2 : i64, tpu.core_type = #tpu.core_type<tc>, window_params = [{transform_indices = @transform_0, window_bounds = array<i64: 128, 32>}, {transform_indices = @transform_1, window_bounds = array<i64: 1, 128>}, {pipeline_mode = #tpu.pipeline_mode<synchronous>, transform_indices = @transform_2, window_bounds = array<i64: 32, 128>}, {pipeline_mode = #tpu.pipeline_mode<synchronous>, transform_indices = @transform_3, window_bounds = array<i64: 1, 128>}, {pipeline_mode = #tpu.pipeline_mode<synchronous>, transform_indices = @transform_4, window_bounds = array<i64: 128, 128>}, {pipeline_mode = #tpu.pipeline_mode<synchronous>, transform_indices = @transform_5, window_bounds = array<i64: 1, 128>}, {pipeline_mode = #tpu.pipeline_mode<synchronous>, transform_indices = @transform_6, window_bounds = array<i64: 8, 128>}]} {
    %c0_i32 = arith.constant 0 : i32
    %0 = arith.cmpi eq, %arg0, %c0_i32 : i32
    %1 = arith.extui %0 : i1 to i32
    %c0_i32_0 = arith.constant 0 : i32
    %2 = arith.cmpi ne, %1, %c0_i32_0 : i32
    scf.if %2 {
      %cst_15 = arith.constant 0.000000e+00 : f32
      %33 = vector.broadcast %cst_15 : f32 to vector<8x32xf32>
      %c0_16 = arith.constant 0 : index
      %c0_17 = arith.constant 0 : index
      %34 = vector.load %arg8[%c0_16, %c0_17] : memref<8x32xf32, #tpu.memory_space<vmem>>, vector<8x32xf32>
      tpu.vector_store %arg8[%c0_16, %c0_17], %33 {strides = array<i32>} : memref<8x32xf32, #tpu.memory_space<vmem>>, vector<8x32xf32>,
      %cst_18 = arith.constant 0.000000e+00 : f32
      %35 = vector.broadcast %cst_18 : f32 to vector<8x1xf32>
      %c0_19 = arith.constant 0 : index
      %c0_20 = arith.constant 0 : index
      %36 = vector.load %arg9[%c0_19, %c0_20] : memref<8x1xf32, #tpu.memory_space<vmem>>, vector<8x1xf32>
      tpu.vector_store %arg9[%c0_19, %c0_20], %35 {strides = array<i32>} : memref<8x1xf32, #tpu.memory_space<vmem>>, vector<8x1xf32>,
    } else {
    }
    %c128_i32 = arith.constant 128 : i32
    %3 = arith.muli %arg0, %c128_i32 : i32
    %4 = tpu.iota {dimensions = array<i32: 0>} : vector<128x1xi32>
    %5 = vector.broadcast %3 : i32 to vector<128x1xi32>
    %6 = arith.addi %5, %4 : vector<128x1xi32>
    %c300_i32 = arith.constant 300 : i32
    %7 = vector.broadcast %c300_i32 : i32 to vector<128x1xi32>
    %8 = arith.cmpi slt, %6, %7 : vector<128x1xi32>
    %c0 = arith.constant 0 : index
    %c0_1 = arith.constant 0 : index
    %9 = vector.load %arg1[%c0, %c0_1] : memref<128x32xf32, #tpu.memory_space<vmem>>, vector<128x32xf32>
    %cst = arith.constant 0.000000e+00 : f32
    %10 = vector.shape_cast %8 : vector<128x1xi1> to vector<128x1xi1>
    %11 = vector.broadcast %10 : vector<128x1xi1> to vector<128x32xi1>
    %12 = vector.broadcast %cst : f32 to vector<128x32xf32>
    %13 = arith.select %11, %9, %12 : vector<128x32xi1>, vector<128x32xf32>
    %14 = arith.extui %8 : vector<128x1xi1> to vector<128x1xi32>
    %15 = arith.sitofp %14 : vector<128x1xi32> to vector<128x1xf32>
    %c0_2 = arith.constant 0 : index
    %c0_3 = arith.constant 0 : index
    %16 = vector.load %arg2[%c0_2, %c0_3] : memref<1x128xi32, #tpu.memory_space<vmem>>, vector<1x128xi32>
    %17 = tpu.iota {dimensions = array<i32: 0>} : vector<8x128xi32>
    %18 = vector.broadcast %16 : vector<1x128xi32> to vector<8x128xi32>
    %19 = arith.cmpi eq, %17, %18 : vector<8x128xi32>
    %20 = arith.extui %19 : vector<8x128xi1> to vector<8x128xi32>
    %21 = arith.sitofp %20 : vector<8x128xi32> to vector<8x128xf32>
    %c0_4 = arith.constant 0 : index
    %c0_5 = arith.constant 0 : index
    %22 = vector.load %arg8[%c0_4, %c0_5] : memref<8x32xf32, #tpu.memory_space<vmem>>, vector<8x32xf32>
    %cst_6 = arith.constant dense<0.000000e+00> : vector<8x32xf32>
    %23 = tpu.matmul %21, %13, %cst_6 {dimension_numbers = #tpu.dot_dimension_numbers<[1], [0], [0], [1], [0, 0, 1, 1], [], []>} : vector<8x128xf32>, vector<128x32xf32>, vector<8x32xf32> -> vector<8x32xf32>
    %24 = arith.addf %22, %23 : vector<8x32xf32>
    %c0_7 = arith.constant 0 : index
    %c0_8 = arith.constant 0 : index
    %25 = vector.load %arg8[%c0_7, %c0_8] : memref<8x32xf32, #tpu.memory_space<vmem>>, vector<8x32xf32>
    tpu.vector_store %arg8[%c0_7, %c0_8], %24 {strides = array<i32>} : memref<8x32xf32, #tpu.memory_space<vmem>>, vector<8x32xf32>,
    %c0_9 = arith.constant 0 : index
    %c0_10 = arith.constant 0 : index
    %26 = vector.load %arg9[%c0_9, %c0_10] : memref<8x1xf32, #tpu.memory_space<vmem>>, vector<8x1xf32>
    %cst_11 = arith.constant dense<0.000000e+00> : vector<8x1xf32>
    %27 = tpu.matmul %21, %15, %cst_11 {dimension_numbers = #tpu.dot_dimension_numbers<[1], [0], [0], [1], [0, 0, 1, 1], [], []>} : vector<8x128xf32>, vector<128x1xf32>, vector<8x1xf32> -> vector<8x1xf32>
    %28 = arith.addf %26, %27 : vector<8x1xf32>
    %c0_12 = arith.constant 0 : index
    %c0_13 = arith.constant 0 : index
    %29 = vector.load %arg9[%c0_12, %c0_13] : memref<8x1xf32, #tpu.memory_space<vmem>>, vector<8x1xf32>
    tpu.vector_store %arg9[%c0_12, %c0_13], %28 {strides = array<i32>} : memref<8x1xf32, #tpu.memory_space<vmem>>, vector<8x1xf32>,
    %c2_i32 = arith.constant 2 : i32
    %30 = arith.cmpi eq, %arg0, %c2_i32 : i32
    %31 = arith.extui %30 : i1 to i32
    %c0_i32_14 = arith.constant 0 : i32
    %32 = arith.cmpi ne, %31, %c0_i32_14 : i32
    scf.if %32 {
      %c0_15 = arith.constant 0 : index
      %c0_16 = arith.constant 0 : index
      %33 = vector.load %arg8[%c0_15, %c0_16] : memref<8x32xf32, #tpu.memory_space<vmem>>, vector<8x32xf32>
      %c0_17 = arith.constant 0 : index
      %c0_18 = arith.constant 0 : index
      %34 = vector.load %arg9[%c0_17, %c0_18] : memref<8x1xf32, #tpu.memory_space<vmem>>, vector<8x1xf32>
      %cst_19 = arith.constant 1.000000e+00 : f32
      %35 = vector.broadcast %cst_19 : f32 to vector<8x1xf32>
      %36 = arith.maximumf %34, %35 : vector<8x1xf32>
      %37 = vector.broadcast %36 : vector<8x1xf32> to vector<8x32xf32>
      %38 = arith.divf %33, %37 : vector<8x32xf32>
      %c0_20 = arith.constant 0 : index
      %c0_21 = arith.constant 0 : index
      %39 = vector.load %arg3[%c0_20, %c0_21] : memref<32x128xf32, #tpu.memory_space<vmem>>, vector<32x128xf32>
      %cst_22 = arith.constant dense<0.000000e+00> : vector<8x128xf32>
      %40 = tpu.matmul %38, %39, %cst_22 {dimension_numbers = #tpu.dot_dimension_numbers<[1], [0], [0], [1], [0, 0, 1, 1], [], []>} : vector<8x32xf32>, vector<32x128xf32>, vector<8x128xf32> -> vector<8x128xf32>
      %c0_23 = arith.constant 0 : index
      %c0_24 = arith.constant 0 : index
      %41 = vector.load %arg4[%c0_23, %c0_24] : memref<1x128xf32, #tpu.memory_space<vmem>>, vector<1x128xf32>
      %42 = vector.broadcast %41 : vector<1x128xf32> to vector<8x128xf32>
      %43 = arith.addf %40, %42 : vector<8x128xf32>
      %cst_25 = arith.constant 0.000000e+00 : f32
      %44 = vector.broadcast %cst_25 : f32 to vector<8x128xf32>
      %45 = arith.maximumf %43, %44 : vector<8x128xf32>
      %c0_26 = arith.constant 0 : index
      %c0_27 = arith.constant 0 : index
      %46 = vector.load %arg5[%c0_26, %c0_27] : memref<128x128xf32, #tpu.memory_space<vmem>>, vector<128x128xf32>
      %cst_28 = arith.constant dense<0.000000e+00> : vector<8x128xf32>
      %47 = tpu.matmul %45, %46, %cst_28 {dimension_numbers = #tpu.dot_dimension_numbers<[1], [0], [0], [1], [0, 0, 1, 1], [], []>} : vector<8x128xf32>, vector<128x128xf32>, vector<8x128xf32> -> vector<8x128xf32>
      %c0_29 = arith.constant 0 : index
      %c0_30 = arith.constant 0 : index
      %48 = vector.load %arg6[%c0_29, %c0_30] : memref<1x128xf32, #tpu.memory_space<vmem>>, vector<1x128xf32>
      %49 = vector.broadcast %48 : vector<1x128xf32> to vector<8x128xf32>
      %50 = arith.addf %47, %49 : vector<8x128xf32>
      %c0_31 = arith.constant 0 : index
      %c0_32 = arith.constant 0 : index
      %51 = vector.load %arg7[%c0_31, %c0_32] : memref<8x128xf32, #tpu.memory_space<vmem>>, vector<8x128xf32>
      tpu.vector_store %arg7[%c0_31, %c0_32], %50 {strides = array<i32>} : memref<8x128xf32, #tpu.memory_space<vmem>>, vector<8x128xf32>,
    } else {
    }
    return
  }
  func.func @transform_0(%arg0: i32) -> (i32, i32) {
    %c0_i32 = arith.constant 0 : i32
    %c0_i32_0 = arith.constant 0 : i32
    return %arg0, %c0_i32 : i32, i32
  }
  func.func @transform_1(%arg0: i32) -> (i32, i32) {
    %c0_i32 = arith.constant 0 : i32
    %c0_i32_0 = arith.constant 0 : i32
    return %c0_i32, %arg0 : i32, i32
  }
  func.func @transform_2(%arg0: i32) -> (i32, i32) {
    %c0_i32 = arith.constant 0 : i32
    %c0_i32_0 = arith.constant 0 : i32
    %c0_i32_1 = arith.constant 0 : i32
    return %c0_i32, %c0_i32_0 : i32, i32
  }
  func.func @transform_3(%arg0: i32) -> (i32, i32) {
    %c0_i32 = arith.constant 0 : i32
    %c0_i32_0 = arith.constant 0 : i32
    %c0_i32_1 = arith.constant 0 : i32
    return %c0_i32, %c0_i32_0 : i32, i32
  }
  func.func @transform_4(%arg0: i32) -> (i32, i32) {
    %c0_i32 = arith.constant 0 : i32
    %c0_i32_0 = arith.constant 0 : i32
    %c0_i32_1 = arith.constant 0 : i32
    return %c0_i32, %c0_i32_0 : i32, i32
  }
  func.func @transform_5(%arg0: i32) -> (i32, i32) {
    %c0_i32 = arith.constant 0 : i32
    %c0_i32_0 = arith.constant 0 : i32
    %c0_i32_1 = arith.constant 0 : i32
    return %c0_i32, %c0_i32_0 : i32, i32
  }
  func.func @transform_6(%arg0: i32) -> (i32, i32) {
    %c0_i32 = arith.constant 0 : i32
    %c0_i32_0 = arith.constant 0 : i32
    %c0_i32_1 = arith.constant 0 : i32
    return %c0_i32, %c0_i32_0 : i32, i32
  }
}

</mosaic_0001>

<llo_original>
// kernel: tpu_custom_call.1
$region0: #{tpu_custom_call.1}
  #allocation0 [shape = 'u32[]', space=smem, size = 0x4, offset = 0x4, fixed_abs, tag = 'smem constant byte address 0x4 - core index']
  #allocation1 [shape = 'u32[144,128]{1,0:T(1,128)}', space=vmem, size = 0x12000, scoped, tag = 'internal scratch']
  #allocation2 [shape = 'f32[8,32]{1,0:T(8,128)}', space=vmem, size = 0x1000, scoped, tag = 'scratch operand']
  #allocation3 [shape = 'f32[8,1]{1,0:T(8,128)}', space=vmem, size = 0x1000, scoped, tag = 'scratch operand']
  %s0 = inlined_call_operand.vmem [shape: f32[300,32], index: 0, kind: input, shape index: {}]
  %s1 = inlined_call_operand.vmem [shape: s32[1,384], index: 1, kind: input, shape index: {}]
  %s2 = inlined_call_operand.vmem [shape: f32[32,128], index: 2, kind: input, shape index: {}]
  %s3 = inlined_call_operand.vmem [shape: f32[1,128], index: 3, kind: input, shape index: {}]
  %s4 = inlined_call_operand.vmem [shape: f32[128,128], index: 4, kind: input, shape index: {}]
  %s5 = inlined_call_operand.vmem [shape: f32[1,128], index: 5, kind: input, shape index: {}]
  %s6 = inlined_call_operand.hbm [shape: f32[8,128], index: 6, kind: output, shape index: {}]
  %s7 = sld [smem:[#allocation0]]
  $region65: #{tpu_custom_call.1} parent=0
    _
  %s9 = ssub.s32 1, %s7
  %s10 = scalar_select 0, %s9, %s7
  $region1: #{tpu_custom_call.1} parent=0
    #allocation4 [shape = 'u8[4096]{0}', space=vmem, size = 0x1000, scoped, tag = 'output window, operand 0, single buffered']
    #allocation5 [shape = 's32[2]{0}', space=sflag, size = 0x8, scoped, tag = 'scoped memory for tpu_custom_call.1']
    %11 = vsyncpa [#allocation5], 0
    loop: start=0, step=1, limit=5
    $region2: #{tpu_custom_call.1} parent=1 // loop_pre_header
      _
    $region3: #{tpu_custom_call.1} parent=1 // loop_header
      %s13 = sphi 0, %s17
      %p14 = scmp.ge.s32.totalorder %s13, 5
      %s23 = sphi 0, %s25
      %s26 = sphi 0, %s23
      %s27 = sphi 0, %s26
      %s43 = sphi 0, %s27
      %s49 = sphi 0, %s51
      %s52 = sphi 0, %s49
      %s53 = sphi 0, %s52
      %s69 = sphi 0, %s53
      %s73 = sphi 0, %s73
      %s75 = sphi 0, %s73
      %s76 = sphi 0, %s75
      %s90 = sphi 0, %s76
      %s94 = sphi 0, %s94
      %s96 = sphi 0, %s94
      %s97 = sphi 0, %s96
      %s111 = sphi 0, %s97
      %s115 = sphi 0, %s115
      %s117 = sphi 0, %s115
      %s118 = sphi 0, %s117
      %s132 = sphi 0, %s118
      %s136 = sphi 0, %s136
      %s138 = sphi 0, %s136
      %s139 = sphi 0, %s138
      %s153 = sphi 0, %s139
      %s157 = sphi 0, %s157
      %s159 = sphi 0, %s157
      %s160 = sphi 0, %s159
      %s174 = sphi 0, %s160
    $region4: #{tpu_custom_call.1} parent=1 // loop_header_branch
      %16 = sbr.rel (%p14) target = $region8
    $region5: #{tpu_custom_call.1} parent=1 // loop_body
      %s18 = ssub.s32 %s13, 1
      %s19 = ssub.s32 %s13, 2
      %s20 = sadd.s32 %s13, 1
      %s21 = ssub.s32 %s13, %s20
      %p22 = scmp.eq.s32.totalorder %s21, 0
      %s24 = sadd.s32 %s23, 1
      %s25 = scalar_select %p22, %s23, %s24
      %p28 = pneg %p22
      %p29 = scmp.eq.s32.totalorder %s13, 2
      %p30 = por %p28, %p29
      %p31 = scmp.ne.s32.totalorder %s23, %s26
      %p32 = scmp.eq.s32.totalorder %s13, 0
      %p33 = por %p31, %p32
      %p34 = scmp.ne.s32.totalorder %s23, %s26
      %p35 = scmp.eq.s32.totalorder %s18, 2
      %p36 = por %p34, %p35
      %p37 = scmp.ne.s32.totalorder %s26, %s27
      %p38 = scmp.eq.s32.totalorder %s18, 0
      %p39 = por %p37, %p38
      %p40 = scmp.ne.s32.totalorder %s26, %s27
      %p41 = scmp.eq.s32.totalorder %s19, 2
      %p42 = por %p40, %p41
      %p44 = scmp.ne.s32.totalorder %s27, %s43
      %p45 = scmp.eq.s32.totalorder %s19, 0
      %p46 = por %p44, %p45
      %s47 = ssub.s32 %s13, %s20
      %p48 = scmp.eq.s32.totalorder %s47, 0
      %s50 = sadd.s32 %s49, 1
      %s51 = scalar_select %p48, %s49, %s50
      %p54 = pneg %p48
      %p55 = scmp.eq.s32.totalorder %s13, 2
      %p56 = por %p54, %p55
      %p57 = scmp.ne.s32.totalorder %s49, %s52
      %p58 = scmp.eq.s32.totalorder %s13, 0
      %p59 = por %p57, %p58
      %p60 = scmp.ne.s32.totalorder %s49, %s52
      %p61 = scmp.eq.s32.totalorder %s18, 2
      %p62 = por %p60, %p61
      %p63 = scmp.ne.s32.totalorder %s52, %s53
      %p64 = scmp.eq.s32.totalorder %s18, 0
      %p65 = por %p63, %p64
      %p66 = scmp.ne.s32.totalorder %s52, %s53
      %p67 = scmp.eq.s32.totalorder %s19, 2
      %p68 = por %p66, %p67
      %p70 = scmp.ne.s32.totalorder %s53, %s69
      %p71 = scmp.eq.s32.totalorder %s19, 0
      %p72 = por %p70, %p71
      %s74 = sadd.s32 %s73, 1
      %p77 = scmp.eq.s32.totalorder %s13, 2
      %p78 = scmp.ne.s32.totalorder %s73, %s75
      %p79 = scmp.eq.s32.totalorder %s13, 0
      %p80 = por %p78, %p79
      %p81 = scmp.ne.s32.totalorder %s73, %s75
      %p82 = scmp.eq.s32.totalorder %s18, 2
      %p83 = por %p81, %p82
      %p84 = scmp.ne.s32.totalorder %s75, %s76
      %p85 = scmp.eq.s32.totalorder %s18, 0
      %p86 = por %p84, %p85
      %p87 = scmp.ne.s32.totalorder %s75, %s76
      %p88 = scmp.eq.s32.totalorder %s19, 2
      %p89 = por %p87, %p88
      %p91 = scmp.ne.s32.totalorder %s76, %s90
      %p92 = scmp.eq.s32.totalorder %s19, 0
      %p93 = por %p91, %p92
      %s95 = sadd.s32 %s94, 1
      %p98 = scmp.eq.s32.totalorder %s13, 2
      %p99 = scmp.ne.s32.totalorder %s94, %s96
      %p100 = scmp.eq.s32.totalorder %s13, 0
      %p101 = por %p99, %p100
      %p102 = scmp.ne.s32.totalorder %s94, %s96
      %p103 = scmp.eq.s32.totalorder %s18, 2
      %p104 = por %p102, %p103
      %p105 = scmp.ne.s32.totalorder %s96, %s97
      %p106 = scmp.eq.s32.totalorder %s18, 0
      %p107 = por %p105, %p106
      %p108 = scmp.ne.s32.totalorder %s96, %s97
      %p109 = scmp.eq.s32.totalorder %s19, 2
      %p110 = por %p108, %p109
      %p112 = scmp.ne.s32.totalorder %s97, %s111
      %p113 = scmp.eq.s32.totalorder %s19, 0
      %p114 = por %p112, %p113
      %s116 = sadd.s32 %s115, 1
      %p119 = scmp.eq.s32.totalorder %s13, 2
      %p120 = scmp.ne.s32.totalorder %s115, %s117
      %p121 = scmp.eq.s32.totalorder %s13, 0
      %p122 = por %p120, %p121
      %p123 = scmp.ne.s32.totalorder %s115, %s117
      %p124 = scmp.eq.s32.totalorder %s18, 2
      %p125 = por %p123, %p124
      %p126 = scmp.ne.s32.totalorder %s117, %s118
      %p127 = scmp.eq.s32.totalorder %s18, 0
      %p128 = por %p126, %p127
      %p129 = scmp.ne.s32.totalorder %s117, %s118
      %p130 = scmp.eq.s32.totalorder %s19, 2
      %p131 = por %p129, %p130
      %p133 = scmp.ne.s32.totalorder %s118, %s132
      %p134 = scmp.eq.s32.totalorder %s19, 0
      %p135 = por %p133, %p134
      %s137 = sadd.s32 %s136, 1
      %p140 = scmp.eq.s32.totalorder %s13, 2
      %p141 = scmp.ne.s32.totalorder %s136, %s138
      %p142 = scmp.eq.s32.totalorder %s13, 0
      %p143 = por %p141, %p142
      %p144 = scmp.ne.s32.totalorder %s136, %s138
      %p145 = scmp.eq.s32.totalorder %s18, 2
      %p146 = por %p144, %p145
      %p147 = scmp.ne.s32.totalorder %s138, %s139
      %p148 = scmp.eq.s32.totalorder %s18, 0
      %p149 = por %p147, %p148
      %p150 = scmp.ne.s32.totalorder %s138, %s139
      %p151 = scmp.eq.s32.totalorder %s19, 2
      %p152 = por %p150, %p151
      %p154 = scmp.ne.s32.totalorder %s139, %s153
      %p155 = scmp.eq.s32.totalorder %s19, 0
      %p156 = por %p154, %p155
      %s158 = sadd.s32 %s157, 1
      %p161 = scmp.eq.s32.totalorder %s13, 2
      %p162 = scmp.ne.s32.totalorder %s157, %s159
      %p163 = scmp.eq.s32.totalorder %s13, 0
      %p164 = por %p162, %p163
      %p165 = scmp.ne.s32.totalorder %s157, %s159
      %p166 = scmp.eq.s32.totalorder %s18, 2
      %p167 = por %p165, %p166
      %p168 = scmp.ne.s32.totalorder %s159, %s160
      %p169 = scmp.eq.s32.totalorder %s18, 0
      %p170 = por %p168, %p169
      %p171 = scmp.ne.s32.totalorder %s159, %s160
      %p172 = scmp.eq.s32.totalorder %s19, 2
      %p173 = por %p171, %p172
      %p175 = scmp.ne.s32.totalorder %s160, %s174
      %p176 = scmp.eq.s32.totalorder %s19, 0
      %p177 = por %p175, %p176
      %p178 = scmp.le.s32.totalorder 1, %s13
      %p179 = scmp.lt.s32.totalorder %s13, 4
      %p180 = pnand %p178, %p179
      %p181 = pneg %p180
      // Predicated region
      $region9: #{tpu_custom_call.1} parent=5 // pred_check
        _
      $region10: #{tpu_custom_call.1} parent=5 // pred_check_branch
        %183 = sbr.rel (%p180) target = $region12
      $region11: #{tpu_custom_call.1} parent=5 // pred_region
        %s184 = ssub.s32 %s13, 1
        // Predicated region
        $region13: #{tpu_custom_call.1} parent=11 // pred_check
          %p185 = pneg %p86
        $region14: #{tpu_custom_call.1} parent=11 // pred_check_branch
          %187 = sbr.rel (%p185) target = $region16
        $region15: #{tpu_custom_call.1} parent=11 // pred_region
          _
        $region16: #{tpu_custom_call.1} parent=11 // pred_fallthru
          _
        // Predicated region
        $region17: #{tpu_custom_call.1} parent=11 // pred_check
          %p188 = pneg %p107
        $region18: #{tpu_custom_call.1} parent=11 // pred_check_branch
          %190 = sbr.rel (%p188) target = $region20
        $region19: #{tpu_custom_call.1} parent=11 // pred_region
          _
        $region20: #{tpu_custom_call.1} parent=11 // pred_fallthru
          _
        // Predicated region
        $region21: #{tpu_custom_call.1} parent=11 // pred_check
          %p191 = pneg %p128
        $region22: #{tpu_custom_call.1} parent=11 // pred_check_branch
          %193 = sbr.rel (%p191) target = $region24
        $region23: #{tpu_custom_call.1} parent=11 // pred_region
          _
        $region24: #{tpu_custom_call.1} parent=11 // pred_fallthru
          _
        // Predicated region
        $region25: #{tpu_custom_call.1} parent=11 // pred_check
          %p194 = pneg %p149
        $region26: #{tpu_custom_call.1} parent=11 // pred_check_branch
          %196 = sbr.rel (%p194) target = $region28
        $region27: #{tpu_custom_call.1} parent=11 // pred_region
          _
        $region28: #{tpu_custom_call.1} parent=11 // pred_fallthru
          _
      $region12: #{tpu_custom_call.1} parent=5 // pred_fallthru
        _
      %p197 = scmp.lt.s32.totalorder %s13, 3
      // Predicated region
      $region29: #{tpu_custom_call.1} parent=5 // pred_check
        %p198 = pneg %p197
      $region30: #{tpu_custom_call.1} parent=5 // pred_check_branch
        %200 = sbr.rel (%p198) target = $region32
      $region31: #{tpu_custom_call.1} parent=5 // pred_region
        // Predicated region
        $region33: #{tpu_custom_call.1} parent=31 // pred_check
          %p201 = pneg %p33
        $region34: #{tpu_custom_call.1} parent=31 // pred_check_branch
          %203 = sbr.rel (%p201) target = $region36
        $region35: #{tpu_custom_call.1} parent=31 // pred_region
          %s204 = smul.u32 16, %s13
          %s205 = ssub.s32 38, %s204
          %p206 = scmp.lt.s32.totalorder %s205, 16
          %s207 = scalar_select %p206, %s205, 16
          %s208 = smul.u32 128, %s207
          %p209 = scmp.lt.s32.totalorder %s204, 37
          %s210 = scalar_select %p209, %s204, 37
          %s211 = smul.addr %s210, 8
          %s212 = scalar_lea.vmem %s0, %s211
          %s213 = smul.u32 16, %s13
          %s214 = ssub.s32 38, %s213
          %p215 = scmp.lt.s32.totalorder %s214, 16
          %s216 = scalar_select %p215, %s214, 16
          %s217 = smul.u32 128, %s216
        $region36: #{tpu_custom_call.1} parent=31 // pred_fallthru
          _
        // Predicated region
        $region37: #{tpu_custom_call.1} parent=31 // pred_check
          %p218 = pneg %p59
        $region38: #{tpu_custom_call.1} parent=31 // pred_check_branch
          %220 = sbr.rel (%p218) target = $region40
        $region39: #{tpu_custom_call.1} parent=31 // pred_region
          %p221 = scmp.lt.s32.totalorder %s13, 2
          %s222 = scalar_select %p221, %s13, 2
          %s223 = scalar_lea.vmem %s1, %s222
        $region40: #{tpu_custom_call.1} parent=31 // pred_fallthru
          _
      $region32: #{tpu_custom_call.1} parent=5 // pred_fallthru
        _
      %p224 = scmp.le.s32.totalorder 1, %s13
      %p225 = scmp.lt.s32.totalorder %s13, 4
      %p226 = pnand %p224, %p225
      %p227 = pneg %p226
      // Predicated region
      $region41: #{tpu_custom_call.1} parent=5 // pred_check
        _
      $region42: #{tpu_custom_call.1} parent=5 // pred_check_branch
        %229 = sbr.rel (%p226) target = $region44
      $region43: #{tpu_custom_call.1} parent=5 // pred_region
        %s230 = ssub.s32 %s13, 1
        %s231 = smul.u32 16, %s18
        %s232 = ssub.s32 38, %s231
        %p233 = scmp.lt.s32.totalorder %s232, 16
        %s234 = scalar_select %p233, %s232, 16
        %s235 = smul.u32 128, %s234
        %p236 = scmp.lt.s32.totalorder %s231, 37
        %s237 = scalar_select %p236, %s231, 37
        %s238 = smul.addr %s237, 8
        %s239 = scalar_lea.vmem %s0, %s238
        %p240 = pneg %p39
        %p241 = pneg %p36
        %p242 = scmp.lt.s32.totalorder %s18, 2
        %s243 = scalar_select %p242, %s18, 2
        %s244 = scalar_lea.vmem %s1, %s243
        %p245 = pneg %p65
        %p246 = pneg %p62
        %p247 = pneg %p86
        %p248 = pneg %p83
        %p249 = pneg %p107
        %p250 = pneg %p104
        %p251 = pneg %p128
        %p252 = pneg %p125
        %p253 = pneg %p149
        %p254 = pneg %p146
        %p255 = pneg %p170
        %p256 = pneg %p167
        %s257 = smul.u32 16, %s18
        %s258 = ssub.s32 38, %s257
        %p259 = scmp.lt.s32.totalorder %s258, 16
        %s260 = scalar_select %p259, %s258, 16
        %s261 = smul.u32 128, %s260
        %p262 = scmp.lt.s32.totalorder %s257, 37
        %s263 = scalar_select %p262, %s257, 37
        %s264 = smul.addr %s263, 8
        %s265 = scalar_lea.vmem %s0, %s264
        %s266 = smul.u32 16, %s18
        %s267 = ssub.s32 38, %s266
        %p268 = scmp.lt.s32.totalorder %s267, 16
        %s269 = scalar_select %p268, %s267, 16
        %s270 = smul.u32 128, %s269
        %p271 = scmp.lt.s32.totalorder %s18, 2
        %s272 = scalar_select %p271, %s18, 2
        %s273 = scalar_lea.vmem %s1, %s272
        %p274 = scmp.eq.s32.totalorder %s18, 0
        // Predicated region
        $region45: #{tpu_custom_call.1} parent=43 // pred_check
          %p275 = pneg %p274
        $region46: #{tpu_custom_call.1} parent=43 // pred_check_branch
          %277 = sbr.rel (%p275) target = $region48
        $region47: #{tpu_custom_call.1} parent=43 // pred_region
          %vm278 = vcmask 261120
          %279 = vst.msk [vmem:[#allocation2] sm:$0xff] %vm278, 0.0
          %vm280 = vcmask 7168
          %281 = vst.msk [vmem:[#allocation3] sm:$0xff] %vm280, 0.0
        $region48: #{tpu_custom_call.1} parent=43 // pred_fallthru
          _
        %s282 = smul.u32 %s18, 128
        %v283 = vlaneseq
        %v284 = vshrl.u32 %v283, 7
        %v285 = vadd.s32 %v284, 8
        %v286 = vadd.s32 %v284, 16
        %v287 = vadd.s32 %v284, 24
        %v288 = vadd.s32 %v284, 32
        %v289 = vadd.s32 %v284, 40
        %v290 = vadd.s32 %v284, 48
        %v291 = vadd.s32 %v284, 56
        %v292 = vadd.s32 %v284, 64
        %v293 = vadd.s32 %v284, 72
        %v294 = vadd.s32 %v284, 80
        %v295 = vadd.s32 %v284, 88
        %v296 = vadd.s32 %v284, 96
        %v297 = vadd.s32 %v284, 104
        %v298 = vadd.s32 %v284, 112
        %v299 = vadd.s32 %v284, 120
        %v300 = vstv %s282
        %v301 = vadd.s32 %v300, %v284
        %v302 = vadd.s32 %v300, %v285
        %v303 = vadd.s32 %v300, %v286
        %v304 = vadd.s32 %v300, %v287
        %v305 = vadd.s32 %v300, %v288
        %v306 = vadd.s32 %v300, %v289
        %v307 = vadd.s32 %v300, %v290
        %v308 = vadd.s32 %v300, %v291
        %v309 = vadd.s32 %v300, %v292
        %v310 = vadd.s32 %v300, %v293
        %v311 = vadd.s32 %v300, %v294
        %v312 = vadd.s32 %v300, %v295
        %v313 = vadd.s32 %v300, %v296
        %v314 = vadd.s32 %v300, %v297
        %v315 = vadd.s32 %v300, %v298
        %v316 = vadd.s32 %v300, %v299
        %vm317 = vcmp.lt.s32.totalorder %v301, 300
        %vm318 = vcmp.lt.s32.totalorder %v302, 300
        %vm319 = vcmp.lt.s32.totalorder %v303, 300
        %vm320 = vcmp.lt.s32.totalorder %v304, 300
        %vm321 = vcmp.lt.s32.totalorder %v305, 300
        %vm322 = vcmp.lt.s32.totalorder %v306, 300
        %vm323 = vcmp.lt.s32.totalorder %v307, 300
        %vm324 = vcmp.lt.s32.totalorder %v308, 300
        %vm325 = vcmp.lt.s32.totalorder %v309, 300
        %vm326 = vcmp.lt.s32.totalorder %v310, 300
        %vm327 = vcmp.lt.s32.totalorder %v311, 300
        %vm328 = vcmp.lt.s32.totalorder %v312, 300
        %vm329 = vcmp.lt.s32.totalorder %v313, 300
        %vm330 = vcmp.lt.s32.totalorder %v314, 300
        %vm331 = vcmp.lt.s32.totalorder %v315, 300
        %vm332 = vcmp.lt.s32.totalorder %v316, 300
        %v333 = vld [vmem:[%s265] sm:$0xff]
        %v334 = vld [vmem:[%s265 + $0x8] sm:$0xff]
        %v335 = vld [vmem:[%s265 + $0x10] sm:$0xff]
        %v336 = vld [vmem:[%s265 + $0x18] sm:$0xff]
        %v337 = vld [vmem:[%s265 + $0x20] sm:$0xff]
        %v338 = vld [vmem:[%s265 + $0x28] sm:$0xff]
        %v339 = vld [vmem:[%s265 + $0x30] sm:$0xff]
        %v340 = vld [vmem:[%s265 + $0x38] sm:$0xff]
        %v341 = vld [vmem:[%s265 + $0x40] sm:$0xff]
        %v342 = vld [vmem:[%s265 + $0x48] sm:$0xff]
        %v343 = vld [vmem:[%s265 + $0x50] sm:$0xff]
        %v344 = vld [vmem:[%s265 + $0x58] sm:$0xff]
        %v345 = vld [vmem:[%s265 + $0x60] sm:$0xff]
        %v346 = vld [vmem:[%s265 + $0x68] sm:$0xff]
        %v347 = vld [vmem:[%s265 + $0x70] sm:$0xff]
        %v348 = vld [vmem:[%s265 + $0x78] sm:$0xff]
        %v349 = vsel %vm317, 1, 0
        %v350 = vsel %vm318, 1, 0
        %v351 = vsel %vm319, 1, 0
        %v352 = vsel %vm320, 1, 0
        %v353 = vsel %vm321, 1, 0
        %v354 = vsel %vm322, 1, 0
        %v355 = vsel %vm323, 1, 0
        %v356 = vsel %vm324, 1, 0
        %v357 = vsel %vm325, 1, 0
        %v358 = vsel %vm326, 1, 0
        %v359 = vsel %vm327, 1, 0
        %v360 = vsel %vm328, 1, 0
        %v361 = vsel %vm329, 1, 0
        %v362 = vsel %vm330, 1, 0
        %v363 = vsel %vm331, 1, 0
        %v364 = vsel %vm332, 1, 0
        %vm365 = vcmp.eq.s32.totalorder %v349, 1
        %vm366 = vcmp.eq.s32.totalorder %v350, 1
        %vm367 = vcmp.eq.s32.totalorder %v351, 1
        %vm368 = vcmp.eq.s32.totalorder %v352, 1
        %vm369 = vcmp.eq.s32.totalorder %v353, 1
        %vm370 = vcmp.eq.s32.totalorder %v354, 1
        %vm371 = vcmp.eq.s32.totalorder %v355, 1
        %vm372 = vcmp.eq.s32.totalorder %v356, 1
        %vm373 = vcmp.eq.s32.totalorder %v357, 1
        %vm374 = vcmp.eq.s32.totalorder %v358, 1
        %vm375 = vcmp.eq.s32.totalorder %v359, 1
        %vm376 = vcmp.eq.s32.totalorder %v360, 1
        %vm377 = vcmp.eq.s32.totalorder %v361, 1
        %vm378 = vcmp.eq.s32.totalorder %v362, 1
        %vm379 = vcmp.eq.s32.totalorder %v363, 1
        %vm380 = vcmp.eq.s32.totalorder %v364, 1
        %v381 = vsel %vm365, %v333, 0.0
        %v382 = vsel %vm366, %v334, 0.0
        %v383 = vsel %vm367, %v335, 0.0
        %v384 = vsel %vm368, %v336, 0.0
        %v385 = vsel %vm369, %v337, 0.0
        %v386 = vsel %vm370, %v338, 0.0
        %v387 = vsel %vm371, %v339, 0.0
        %v388 = vsel %vm372, %v340, 0.0
        %v389 = vsel %vm373, %v341, 0.0
        %v390 = vsel %vm374, %v342, 0.0
        %v391 = vsel %vm375, %v343, 0.0
        %v392 = vsel %vm376, %v344, 0.0
        %v393 = vsel %vm377, %v345, 0.0
        %v394 = vsel %vm378, %v346, 0.0
        %v395 = vsel %vm379, %v347, 0.0
        %v396 = vsel %vm380, %v348, 0.0
        %v397 = vcvt.s32.f32 %v349
        %v398 = vcvt.s32.f32 %v350
        %v399 = vcvt.s32.f32 %v351
        %v400 = vcvt.s32.f32 %v352
        %v401 = vcvt.s32.f32 %v353
        %v402 = vcvt.s32.f32 %v354
        %v403 = vcvt.s32.f32 %v355
        %v404 = vcvt.s32.f32 %v356
        %v405 = vcvt.s32.f32 %v357
        %v406 = vcvt.s32.f32 %v358
        %v407 = vcvt.s32.f32 %v359
        %v408 = vcvt.s32.f32 %v360
        %v409 = vcvt.s32.f32 %v361
        %v410 = vcvt.s32.f32 %v362
        %v411 = vcvt.s32.f32 %v363
        %v412 = vcvt.s32.f32 %v364
        %v413 = vld [vmem:[%s273] sm:$0x1]
        %v414 = vlaneseq
        %v415 = vshrl.u32 %v414, 7
        %v416 = vsub.s32 0, %v415
        %v417 = vrot.slane %v413, %v416
        %vm418 = vcmp.eq.s32.totalorder %v284, %v417
        %v419 = vsel %vm418, 1, 0
        %v420 = vcvt.s32.f32 %v419
        %v421 = vld [vmem:[#allocation2] sm:$0xff]
        %422 = vmatprep.subr.mxu0 0.0
        %423 = vmatpush1.msra.mxu0 %v381
        %424 = vmatprep.subr.mxu0 0.0
        %425 = vmatpush1.msra.mxu0 %v382
        %426 = vmatprep.subr.mxu0 0.0
        %427 = vmatpush1.msra.mxu0 %v383
        %428 = vmatprep.subr.mxu0 0.0
        %429 = vmatpush1.msra.mxu0 %v384
        %430 = vmatprep.subr.mxu0 0.0
        %431 = vmatpush1.msra.mxu0 %v385
        %432 = vmatprep.subr.mxu0 0.0
        %433 = vmatpush1.msra.mxu0 %v386
        %434 = vmatprep.subr.mxu0 0.0
        %435 = vmatpush1.msra.mxu0 %v387
        %436 = vmatprep.subr.mxu0 0.0
        %437 = vmatpush1.msra.mxu0 %v388
        %438 = vmatprep.subr.mxu0 0.0
        %439 = vmatpush1.msra.mxu0 %v389
        %440 = vmatprep.subr.mxu0 0.0
        %441 = vmatpush1.msra.mxu0 %v390
        %442 = vmatprep.subr.mxu0 0.0
        %443 = vmatpush1.msra.mxu0 %v391
        %444 = vmatprep.subr.mxu0 0.0
        %445 = vmatpush1.msra.mxu0 %v392
        %446 = vmatprep.subr.mxu0 0.0
        %447 = vmatpush1.msra.mxu0 %v393
        %448 = vmatprep.subr.mxu0 0.0
        %449 = vmatpush1.msra.mxu0 %v394
        %450 = vmatprep.subr.mxu0 0.0
        %451 = vmatpush1.msra.mxu0 %v395
        %452 = vmatprep.subr.mxu0 0.0
        %453 = vmatpush1.msra.mxu0 %v396
        %454 = vmatprep.subr.mxu0 0.0
        %455 = vmatpush1.msra.mxu0 0.0
        %456 = vmatprep.subr.mxu0 0.0
        %457 = vmatpush1.msra.mxu0 0.0
        %458 = vmatprep.subr.mxu0 0.0
        %459 = vmatpush1.msra.mxu0 0.0
        %460 = vmatprep.subr.mxu0 0.0
        %461 = vmatpush1.msra.mxu0 0.0
        %462 = vmatprep.subr.mxu0 0.0
        %463 = vmatpush1.msra.mxu0 0.0
        %464 = vmatprep.subr.mxu0 0.0
        %465 = vmatpush1.msra.mxu0 0.0
        %466 = vmatprep.subr.mxu0 0.0
        %467 = vmatpush1.msra.mxu0 0.0
        %468 = vmatprep.subr.mxu0 0.0
        %469 = vmatpush1.msra.mxu0 0.0
        %470 = vmatprep.subr.mxu0 0.0
        %471 = vmatpush1.msra.mxu0 0.0
        %472 = vmatprep.subr.mxu0 0.0
        %473 = vmatpush1.msra.mxu0 0.0
        %474 = vmatprep.subr.mxu0 0.0
        %475 = vmatpush1.msra.mxu0 0.0
        %476 = vmatprep.subr.mxu0 0.0
        %477 = vmatpush1.msra.mxu0 0.0
        %478 = vmatprep.subr.mxu0 0.0
        %479 = vmatpush1.msra.mxu0 0.0
        %480 = vmatprep.subr.mxu0 0.0
        %481 = vmatpush1.msra.mxu0 0.0
        %482 = vmatprep.subr.mxu0 0.0
        %483 = vmatpush1.msra.mxu0 0.0
        %484 = vmatprep.subr.mxu0 0.0
        %485 = vmatpush1.msra.mxu0 0.0
        %486 = vmatprep.mubr.f32.mxu0 0.0
        %487 = vmatmul.mubr.f32.gmra.mrb[0].mxu0 %v420
        %v488 = vpop.f32.mrb[0].mxu0
        %v489 = vadd.f32 0.0, %v488
        %v490 = vpop.f32.mrb[0].mxu0
        %491 = vdwg.mxu0
        %v492 = vadd.f32 %v421, %v489
        %vm493 = vcmask 261120
        %494 = vst.msk [vmem:[#allocation2] sm:$0xff] %vm493, %v492
        %v495 = vld [vmem:[#allocation3] sm:$0xff]
        %496 = vmatprep.subr.mxu0 0.0
        %497 = vmatpush1.msra.mxu0 %v397
        %498 = vmatprep.subr.mxu0 0.0
        %499 = vmatpush1.msra.mxu0 %v398
        %500 = vmatprep.subr.mxu0 0.0
        %501 = vmatpush1.msra.mxu0 %v399
        %502 = vmatprep.subr.mxu0 0.0
        %503 = vmatpush1.msra.mxu0 %v400
        %504 = vmatprep.subr.mxu0 0.0
        %505 = vmatpush1.msra.mxu0 %v401
        %506 = vmatprep.subr.mxu0 0.0
        %507 = vmatpush1.msra.mxu0 %v402
        %508 = vmatprep.subr.mxu0 0.0
        %509 = vmatpush1.msra.mxu0 %v403
        %510 = vmatprep.subr.mxu0 0.0
        %511 = vmatpush1.msra.mxu0 %v404
        %512 = vmatprep.subr.mxu0 0.0
        %513 = vmatpush1.msra.mxu0 %v405
        %514 = vmatprep.subr.mxu0 0.0
        %515 = vmatpush1.msra.mxu0 %v406
        %516 = vmatprep.subr.mxu0 0.0
        %517 = vmatpush1.msra.mxu0 %v407
        %518 = vmatprep.subr.mxu0 0.0
        %519 = vmatpush1.msra.mxu0 %v408
        %520 = vmatprep.subr.mxu0 0.0
        %521 = vmatpush1.msra.mxu0 %v409
        %522 = vmatprep.subr.mxu0 0.0
        %523 = vmatpush1.msra.mxu0 %v410
        %524 = vmatprep.subr.mxu0 0.0
        %525 = vmatpush1.msra.mxu0 %v411
        %526 = vmatprep.subr.mxu0 0.0
        %527 = vmatpush1.msra.mxu0 %v412
        %528 = vmatprep.subr.mxu0 0.0
        %529 = vmatpush1.msra.mxu0 0.0
        %530 = vmatprep.subr.mxu0 0.0
        %531 = vmatpush1.msra.mxu0 0.0
        %532 = vmatprep.subr.mxu0 0.0
        %533 = vmatpush1.msra.mxu0 0.0
        %534 = vmatprep.subr.mxu0 0.0
        %535 = vmatpush1.msra.mxu0 0.0
        %536 = vmatprep.subr.mxu0 0.0
        %537 = vmatpush1.msra.mxu0 0.0
        %538 = vmatprep.subr.mxu0 0.0
        %539 = vmatpush1.msra.mxu0 0.0
        %540 = vmatprep.subr.mxu0 0.0
        %541 = vmatpush1.msra.mxu0 0.0
        %542 = vmatprep.subr.mxu0 0.0
        %543 = vmatpush1.msra.mxu0 0.0
        %544 = vmatprep.subr.mxu0 0.0
        %545 = vmatpush1.msra.mxu0 0.0
        %546 = vmatprep.subr.mxu0 0.0
        %547 = vmatpush1.msra.mxu0 0.0
        %548 = vmatprep.subr.mxu0 0.0
        %549 = vmatpush1.msra.mxu0 0.0
        %550 = vmatprep.subr.mxu0 0.0
        %551 = vmatpush1.msra.mxu0 0.0
        %552 = vmatprep.subr.mxu0 0.0
        %553 = vmatpush1.msra.mxu0 0.0
        %554 = vmatprep.subr.mxu0 0.0
        %555 = vmatpush1.msra.mxu0 0.0
        %556 = vmatprep.subr.mxu0 0.0
        %557 = vmatpush1.msra.mxu0 0.0
        %558 = vmatprep.subr.mxu0 0.0
        %559 = vmatpush1.msra.mxu0 0.0
        %560 = vmatprep.mubr.f32.mxu0 0.0
        %561 = vmatmul.mubr.f32.gmra.mrb[0].mxu0 %v420
        %v562 = vpop.f32.mrb[0].mxu0
        %v563 = vadd.f32 0.0, %v562
        %v564 = vpop.f32.mrb[0].mxu0
        %565 = vdwg.mxu0
        %v566 = vadd.f32 %v495, %v563
        %vm567 = vcmask 7168
        %568 = vst.msk [vmem:[#allocation3] sm:$0xff] %vm567, %v566
        %p569 = scmp.eq.s32.totalorder %s18, 2
        // Predicated region
        $region49: #{tpu_custom_call.1} parent=43 // pred_check
          %p570 = pneg %p569
        $region50: #{tpu_custom_call.1} parent=43 // pred_check_branch
          %572 = sbr.rel (%p570) target = $region52
        $region51: #{tpu_custom_call.1} parent=43 // pred_region
          %v573 = vld [vmem:[#allocation2] sm:$0xff]
          %v574 = vld [vmem:[#allocation3] sm:$0xff]
          %v575 = vmax.f32 %v574, 1.0
          %577 = vset.pattern.permute.xlu0 0
          %578 = vperm.xlu0 %577, %v575
          %v579 = vpop.permute.xlu0 %578
          %v581 = vrcp.pop %v579
          %v582 = vmul.f32 %v573, %v581
          %v583 = vld [vmem:[%s2] sm:$0xff]
          %v584 = vld [vmem:[%s2 + $0x8] sm:$0xff]
          %v585 = vld [vmem:[%s2 + $0x10] sm:$0xff]
          %v586 = vld [vmem:[%s2 + $0x18] sm:$0xff]
          %v587 = vld [vmem:[%s3] sm:$0x1]
          %v589 = vlaneseq
          %v590 = vshrl.u32 %v589, 7
          %v591 = vsub.s32 0, %v590
          %v592 = vrot.slane %v587, %v591
          %v595 = vsel %vm493, %v582, 0
          %597 = vmatprep.subr.mxu0 0.0
          %598 = vmatpush1.msra.mxu0 %v583
          %599 = vmatprep.subr.mxu0 0.0
          %600 = vmatpush1.msra.mxu0 %v584
          %601 = vmatprep.subr.mxu0 0.0
          %602 = vmatpush1.msra.mxu0 %v585
          %603 = vmatprep.subr.mxu0 0.0
          %604 = vmatpush1.msra.mxu0 %v586
          %605 = vmatprep.subr.mxu0 0.0
          %606 = vmatpush1.msra.mxu0 0.0
          %607 = vmatprep.subr.mxu0 0.0
          %608 = vmatpush1.msra.mxu0 0.0
          %609 = vmatprep.subr.mxu0 0.0
          %610 = vmatpush1.msra.mxu0 0.0
          %611 = vmatprep.subr.mxu0 0.0
          %612 = vmatpush1.msra.mxu0 0.0
          %613 = vmatprep.subr.mxu0 0.0
          %614 = vmatpush1.msra.mxu0 0.0
          %615 = vmatprep.subr.mxu0 0.0
          %616 = vmatpush1.msra.mxu0 0.0
          %617 = vmatprep.subr.mxu0 0.0
          %618 = vmatpush1.msra.mxu0 0.0
          %619 = vmatprep.subr.mxu0 0.0
          %620 = vmatpush1.msra.mxu0 0.0
          %621 = vmatprep.subr.mxu0 0.0
          %622 = vmatpush1.msra.mxu0 0.0
          %623 = vmatprep.subr.mxu0 0.0
          %624 = vmatpush1.msra.mxu0 0.0
          %625 = vmatprep.subr.mxu0 0.0
          %626 = vmatpush1.msra.mxu0 0.0
          %627 = vmatprep.subr.mxu0 0.0
          %628 = vmatpush1.msra.mxu0 0.0
          %629 = vmatprep.subr.mxu0 0.0
          %630 = vmatpush1.msra.mxu0 0.0
          %631 = vmatprep.subr.mxu0 0.0
          %632 = vmatpush1.msra.mxu0 0.0
          %633 = vmatprep.subr.mxu0 0.0
          %634 = vmatpush1.msra.mxu0 0.0
          %635 = vmatprep.subr.mxu0 0.0
          %636 = vmatpush1.msra.mxu0 0.0
          %637 = vmatprep.subr.mxu0 0.0
          %638 = vmatpush1.msra.mxu0 0.0
          %639 = vmatprep.subr.mxu0 0.0
          %640 = vmatpush1.msra.mxu0 0.0
          %641 = vmatprep.subr.mxu0 0.0
          %642 = vmatpush1.msra.mxu0 0.0
          %643 = vmatprep.subr.mxu0 0.0
          %644 = vmatpush1.msra.mxu0 0.0
          %645 = vmatprep.subr.mxu0 0.0
          %646 = vmatpush1.msra.mxu0 0.0
          %647 = vmatprep.subr.mxu0 0.0
          %648 = vmatpush1.msra.mxu0 0.0
          %649 = vmatprep.subr.mxu0 0.0
          %650 = vmatpush1.msra.mxu0 0.0
          %651 = vmatprep.subr.mxu0 0.0
          %652 = vmatpush1.msra.mxu0 0.0
          %653 = vmatprep.subr.mxu0 0.0
          %654 = vmatpush1.msra.mxu0 0.0
          %655 = vmatprep.subr.mxu0 0.0
          %656 = vmatpush1.msra.mxu0 0.0
          %657 = vmatprep.subr.mxu0 0.0
          %658 = vmatpush1.msra.mxu0 0.0
          %659 = vmatprep.subr.mxu0 0.0
          %660 = vmatpush1.msra.mxu0 0.0
          %661 = vmatprep.mubr.f32.mxu0 0.0
          %662 = vmatmul.mubr.f32.gmra.mrb[0].mxu0 %v595
          %v663 = vpop.f32.mrb[0].mxu0
          %v664 = vadd.f32 %v592, %v663
          %v665 = vpop.f32.mrb[0].mxu0
          %666 = vdwg.mxu0
          %v667 = vmax.f32 %v664, 0.0
          %v668 = vld [vmem:[%s4] sm:$0xff]
          %v669 = vld [vmem:[%s4 + $0x8] sm:$0xff]
          %v670 = vld [vmem:[%s4 + $0x10] sm:$0xff]
          %v671 = vld [vmem:[%s4 + $0x18] sm:$0xff]
          %v672 = vld [vmem:[%s4 + $0x20] sm:$0xff]
          %v673 = vld [vmem:[%s4 + $0x28] sm:$0xff]
          %v674 = vld [vmem:[%s4 + $0x30] sm:$0xff]
          %v675 = vld [vmem:[%s4 + $0x38] sm:$0xff]
          %v676 = vld [vmem:[%s4 + $0x40] sm:$0xff]
          %v677 = vld [vmem:[%s4 + $0x48] sm:$0xff]
          %v678 = vld [vmem:[%s4 + $0x50] sm:$0xff]
          %v679 = vld [vmem:[%s4 + $0x58] sm:$0xff]
          %v680 = vld [vmem:[%s4 + $0x60] sm:$0xff]
          %v681 = vld [vmem:[%s4 + $0x68] sm:$0xff]
          %v682 = vld [vmem:[%s4 + $0x70] sm:$0xff]
          %v683 = vld [vmem:[%s4 + $0x78] sm:$0xff]
          %v684 = vld [vmem:[%s5] sm:$0x1]
          %v686 = vlaneseq
          %v687 = vshrl.u32 %v686, 7
          %v688 = vsub.s32 0, %v687
          %v689 = vrot.slane %v684, %v688
          %691 = vmatprep.subr.mxu0 0.0
          %692 = vmatpush1.msra.mxu0 %v668
          %693 = vmatprep.subr.mxu0 0.0
          %694 = vmatpush1.msra.mxu0 %v669
          %695 = vmatprep.subr.mxu0 0.0
          %696 = vmatpush1.msra.mxu0 %v670
          %697 = vmatprep.subr.mxu0 0.0
          %698 = vmatpush1.msra.mxu0 %v671
          %699 = vmatprep.subr.mxu0 0.0
          %700 = vmatpush1.msra.mxu0 %v672
          %701 = vmatprep.subr.mxu0 0.0
          %702 = vmatpush1.msra.mxu0 %v673
          %703 = vmatprep.subr.mxu0 0.0
          %704 = vmatpush1.msra.mxu0 %v674
          %705 = vmatprep.subr.mxu0 0.0
          %706 = vmatpush1.msra.mxu0 %v675
          %707 = vmatprep.subr.mxu0 0.0
          %708 = vmatpush1.msra.mxu0 %v676
          %709 = vmatprep.subr.mxu0 0.0
          %710 = vmatpush1.msra.mxu0 %v677
          %711 = vmatprep.subr.mxu0 0.0
          %712 = vmatpush1.msra.mxu0 %v678
          %713 = vmatprep.subr.mxu0 0.0
          %714 = vmatpush1.msra.mxu0 %v679
          %715 = vmatprep.subr.mxu0 0.0
          %716 = vmatpush1.msra.mxu0 %v680
          %717 = vmatprep.subr.mxu0 0.0
          %718 = vmatpush1.msra.mxu0 %v681
          %719 = vmatprep.subr.mxu0 0.0
          %720 = vmatpush1.msra.mxu0 %v682
          %721 = vmatprep.subr.mxu0 0.0
          %722 = vmatpush1.msra.mxu0 %v683
          %723 = vmatprep.subr.mxu0 0.0
          %724 = vmatpush1.msra.mxu0 0.0
          %725 = vmatprep.subr.mxu0 0.0
          %726 = vmatpush1.msra.mxu0 0.0
          %727 = vmatprep.subr.mxu0 0.0
          %728 = vmatpush1.msra.mxu0 0.0
          %729 = vmatprep.subr.mxu0 0.0
          %730 = vmatpush1.msra.mxu0 0.0
          %731 = vmatprep.subr.mxu0 0.0
          %732 = vmatpush1.msra.mxu0 0.0
          %733 = vmatprep.subr.mxu0 0.0
          %734 = vmatpush1.msra.mxu0 0.0
          %735 = vmatprep.subr.mxu0 0.0
          %736 = vmatpush1.msra.mxu0 0.0
          %737 = vmatprep.subr.mxu0 0.0
          %738 = vmatpush1.msra.mxu0 0.0
          %739 = vmatprep.subr.mxu0 0.0
          %740 = vmatpush1.msra.mxu0 0.0
          %741 = vmatprep.subr.mxu0 0.0
          %742 = vmatpush1.msra.mxu0 0.0
          %743 = vmatprep.subr.mxu0 0.0
          %744 = vmatpush1.msra.mxu0 0.0
          %745 = vmatprep.subr.mxu0 0.0
          %746 = vmatpush1.msra.mxu0 0.0
          %747 = vmatprep.subr.mxu0 0.0
          %748 = vmatpush1.msra.mxu0 0.0
          %749 = vmatprep.subr.mxu0 0.0
          %750 = vmatpush1.msra.mxu0 0.0
          %751 = vmatprep.subr.mxu0 0.0
          %752 = vmatpush1.msra.mxu0 0.0
          %753 = vmatprep.subr.mxu0 0.0
          %754 = vmatpush1.msra.mxu0 0.0
          %755 = vmatprep.mubr.f32.mxu0 0.0
          %756 = vmatmul.mubr.f32.gmra.mrb[0].mxu0 %v667
          %v757 = vpop.f32.mrb[0].mxu0
          %v758 = vadd.f32 %v689, %v757
          %v759 = vpop.f32.mrb[0].mxu0
          %760 = vdwg.mxu0
          %761 = vst [vmem:[#allocation4] sm:$0xff] %v758
        $region52: #{tpu_custom_call.1} parent=43 // pred_fallthru
          _
        // Predicated region
        $region53: #{tpu_custom_call.1} parent=43 // pred_check
          %p762 = pneg %p167
        $region54: #{tpu_custom_call.1} parent=43 // pred_check_branch
          %764 = sbr.rel (%p762) target = $region56
        $region55: #{tpu_custom_call.1} parent=43 // pred_region
          %s766 = ssub.s32 128, 128
          %767 = vsyncadd [#allocation5], %s766
          %s769 = sshll.u32 [#allocation4], 4
          %s770 = int_to_ptr.vmem [resolvable:$true] %s769
          %772 = dma.vmem_to_hbm [thread:$0]  %s770, 128, %s6, [#allocation5]
        $region56: #{tpu_custom_call.1} parent=43 // pred_fallthru
          _
        // Predicated region
        $region57: #{tpu_custom_call.1} parent=43 // pred_check
          %p773 = pneg %p167
        $region58: #{tpu_custom_call.1} parent=43 // pred_check_branch
          %775 = sbr.rel (%p773) target = $region60
        $region59: #{tpu_custom_call.1} parent=43 // pred_region
          %776 = dma.done [#allocation5], 128
        $region60: #{tpu_custom_call.1} parent=43 // pred_fallthru
          _
      $region44: #{tpu_custom_call.1} parent=5 // pred_fallthru
        _
      %p777 = scmp.le.s32.totalorder 2, %s13
      // Predicated region
      $region61: #{tpu_custom_call.1} parent=5 // pred_check
        %p778 = pneg %p777
      $region62: #{tpu_custom_call.1} parent=5 // pred_check_branch
        %780 = sbr.rel (%p778) target = $region64
      $region63: #{tpu_custom_call.1} parent=5 // pred_region
        %s781 = ssub.s32 %s13, 2
      $region64: #{tpu_custom_call.1} parent=5 // pred_fallthru
        _
    $region6: #{tpu_custom_call.1} parent=1 // loop_footer
      %s17 = sadd.s32 1, %s13
    $region7: #{tpu_custom_call.1} parent=1 // loop_footer_branch
      %12 = sbr.rel target = $region3
    $region8: #{tpu_custom_call.1} parent=1 // loop_exit
      _
    %782 = vsyncpa [#allocation5], 1
    %s783 = scalar_lea.sflag [#allocation5], 1
    %784 = vsyncpa %s783, 1

</llo_original>
